<compile_context>
chip_gen: v7x
topology: tpu7x:2x2x1
jax: 0.10.0
libtpu: 0.0.40
codegen_flags: <defaults>
</compile_context>

<pallas_src>
import numpy as np
import jax
import jax.numpy as jnp
from jax import lax
from jax.experimental import pallas as pl
from jax.experimental.pallas import tpu as pltpu

EPS_IN = 1e-5        # InstanceNorm2d default eps
LRELU_SLOPE = 0.2    # LeakyReLU negative slope
KH = KW = 4          # conv kernel
STRIDE = 2
PAD = 1


# ---------------------------------------------------------------------------
# Spectral norm (parameter preprocessing, plain JAX: mimics torch power iter).
# ---------------------------------------------------------------------------
def spectral_normalize(w, key, n_power_iterations=1, eps=1e-12):
    cout = w.shape[0]
    w_mat = w.reshape(cout, -1)
    u = jax.random.normal(key, (cout,), dtype=w.dtype)
    u = u / (jnp.linalg.norm(u) + eps)
    v = None
    for _ in range(n_power_iterations):
        v = w_mat.T @ u
        v = v / (jnp.linalg.norm(v) + eps)
        u = w_mat @ v
        u = u / (jnp.linalg.norm(u) + eps)
    sigma = u @ (w_mat @ v)
    return w / sigma


def _round_up(x, m):
    return ((x + m - 1) // m) * m


# ---------------------------------------------------------------------------
# Fused Down forward: conv(4,2,1) + instance norm + leaky relu in one kernel.
# ---------------------------------------------------------------------------
def down_forward(x_nchw, w_sn, *, compute_dtype=jnp.bfloat16):
    """x_nchw: (N, Cin, H, W) f32; w_sn: (Cout, Cin, 4, 4) spectrally normalized."""
    N, Cin, H, W = x_nchw.shape
    Cout = w_sn.shape[0]
    assert w_sn.shape == (Cout, Cin, KH, KW)
    assert H % 2 == 0 and W % 2 == 0, "k=4,s=2,p=1 conv expects even spatial dims"

    OH, OW = H // 2, W // 2
    KC8 = 8 * Cin                      # lanes = (kw in 0..3, row-phase, ci)
    OWP = max(16, _round_up(OW, 16))   # flat row pitch, bf16-sublane aligned
    GE0 = OH + 1                       # row groups per image (incl. 1 junk)
    Cout_p = _round_up(Cout, 128)      # lane-dense output channels
    in_bytes = jnp.dtype(compute_dtype).itemsize

    # ----- tiling choices ---------------------------------------------------
    ROW_TARGET = int(max(512, min(4096, (3 * 2**20) // max(1, KC8 * in_bytes))))
    rows_per_b = GE0 * OWP
    if rows_per_b <= ROW_TARGET:
        # small images: fold several batch elements into one grid step
        NB = max(1, min(N, 8, ROW_TARGET // rows_per_b))
        if N >= 2:
            NB = max(1, min(NB, N // 2))   # keep G >= 2 (v7x has 2 TCs)
        while N % NB:
            NB -= 1
        n_mt = 1
        TOH = GE0
        GE = GE0
    else:
        # big images: tile the output row-groups (NB = 1)
        NB = 1
        n_mt = -(-rows_per_b // ROW_TARGET)
        TOH = -(-GE0 // n_mt)
        GE = TOH * n_mt                    # <= n_mt-1 junk groups of padding
    G = N // NB
    MROWS = NB * GE * OWP                  # resident output rows per (g, c)
    NR = MROWS // n_mt                     # matmul M rows per grid step
    NTOP = NR - OWP

    # Cout tiling: 256 wide when it divides and the resident tile stays small.
    if Cout_p % 256 == 0 and 2 * MROWS * 256 * 4 <= 24 * 2**20:
        COUT_T = 256
    else:
        COUT_T = 128
    n_ct = Cout_p // COUT_T

    # finalize chunking (bounds vreg pressure in the epilogue)
    CHG = max(1, min(OH, max(1, 512 // OWP)))
    while OH % CHG:
        CHG -= 1
    CHROWS = CHG * OWP
    n_chunks = OH // CHG

    # ----- input: NCHW -> lane-packed layout (only 2 vertical shifts left) --
    # P[n, r, ow, (kw, pr, ci)] = xpad[n, ci, 2r+pr, 2ow+kw]
    xc = x_nchw.astype(compute_dtype)
    xp = jnp.pad(xc, ((0, 0), (0, 0), (PAD, PAD), (PAD, PAD)))       # (N,Cin,H+2,W+2)
    xv = xp.reshape(N, Cin, GE0, 2, W + 2)
    xv = jnp.transpose(xv, (0, 2, 3, 1, 4))                          # (N,GE0,2,Cin,W+2)
    taps = [xv[..., k:k + 2 * OW - 1:2] for k in range(KW)]          # 4 x (N,GE0,2,Cin,OW)
    pk = jnp.stack(taps, axis=2)                                     # (N,GE0,4,2,Cin,OW)
    pk = jnp.transpose(pk, (0, 1, 5, 2, 3, 4))                       # (N,GE0,OW,4,2,Cin)
    pk = pk.reshape(N, GE0, OW, KC8)
    pk = jnp.pad(pk, ((0, 0), (0, GE - GE0), (0, OWP - OW), (0, 0)))
    x_main = pk.reshape(G, MROWS, KC8)                               # b-major flat rows

    # Per-tile halo (one row group) for the second (shift-by-OWP) operand.
    if n_mt > 1:
        hal = x_main.reshape(G, n_mt, NR, KC8)[:, 1:, :OWP, :]
        hal = jnp.pad(hal, ((0, 0), (0, 1), (0, 0), (0, 0)))
    else:
        hal = jnp.zeros((G, 1, OWP, KC8), compute_dtype)
    x_halo = hal.reshape(G, n_mt * OWP, KC8)

    # ----- weights: (Cout,Cin,4,4) -> 2 shift matrices (2, 8*Cin, Cout_p) ---
    w2 = w_sn.reshape(Cout, Cin, 2, 2, KW)                           # (co,ci,s,pr,kw)
    wt = jnp.transpose(w2, (2, 4, 3, 1, 0))                          # (s,kw,pr,ci,co)
    w_kernel = wt.reshape(2, KC8, Cout)
    if Cout_p != Cout:
        w_kernel = jnp.pad(w_kernel, ((0, 0), (0, 0), (0, Cout_p - Cout)))
    w_kernel = w_kernel.astype(compute_dtype)

    # ----- kernel ------------------------------------------------------------
    def kernel(x_ref, xh_ref, w_ref, o_ref):
        # x_ref:  (NR, KC8)       lane-packed rows for this m tile
        # xh_ref: (OWP, KC8)      next row group (halo) for the shifted operand
        # w_ref:  (2, KC8, COUT_T)
        # o_ref:  (MROWS, COUT_T) resident output across the m axis (f32)
        m = pl.program_id(2)
        row0 = pl.multiple_of(m * NR, OWP)
        w0 = w_ref[0]
        w1 = w_ref[1]

        # 4x4/stride-2 conv == 2 accumulated matmuls over row-aligned slices.
        top = (jnp.dot(x_ref[0:NTOP, :], w0, preferred_element_type=jnp.float32)
               + jnp.dot(x_ref[OWP:NR, :], w1, preferred_element_type=jnp.float32))
        bot = (jnp.dot(x_ref[NTOP:NR, :], w0, preferred_element_type=jnp.float32)
               + jnp.dot(xh_ref[...], w1, preferred_element_type=jnp.float32))
        o_ref[pl.ds(row0, NTOP), :] = top
        o_ref[pl.ds(pl.multiple_of(row0 + NTOP, OWP), OWP), :] = bot

        @pl.when(m == pl.num_programs(2) - 1)
        def _finalize():
            inv_n = jnp.float32(1.0 / float(OH * OW))
            if OW != OWP:
                colf = ((lax.broadcasted_iota(jnp.int32, (CHROWS, 1), 0) % OWP)
                        < OW).astype(jnp.float32)
            else:
                colf = None

            for b in range(NB):                    # NB small, static unroll
                base = b * GE * OWP

                def _sum_body(i, acc, base=base):
                    st = pl.multiple_of(base + i * CHROWS, OWP)
                    v = o_ref[pl.ds(st, CHROWS), :]
                    if colf is not None:
                        v = v * colf
                    return acc + jnp.sum(v, axis=0, keepdims=True)

                s = lax.fori_loop(0, n_chunks, _sum_body,
                                  jnp.zeros((1, COUT_T), jnp.float32))
                mean = s * inv_n

                def _var_body(i, acc, base=base, mean=mean):
                    st = pl.multiple_of(base + i * CHROWS, OWP)
                    v = o_ref[pl.ds(st, CHROWS), :] - mean
                    if colf is not None:
                        v = v * colf
                    return acc + jnp.sum(v * v, axis=0, keepdims=True)

                ss = lax.fori_loop(0, n_chunks, _var_body,
                                   jnp.zeros((1, COUT_T), jnp.float32))
                scale = lax.rsqrt(ss * inv_n + EPS_IN)
                shift = mean * scale

                def _norm_body(i, carry, base=base, scale=scale, shift=shift):
                    st = pl.multiple_of(base + i * CHROWS, OWP)
                    y = o_ref[pl.ds(st, CHROWS), :] * scale - shift
                    o_ref[pl.ds(st, CHROWS), :] = jnp.maximum(y, LRELU_SLOPE * y)
                    return carry

                lax.fori_loop(0, n_chunks, _norm_body, 0)

    # ----- VMEM budget / cost estimate ---------------------------------------
    est = (2 * NR * KC8 * in_bytes            # x tile (double buffered)
           + 2 * OWP * KC8 * in_bytes         # halo
           + 2 * 2 * KC8 * COUT_T * in_bytes  # weights
           + 2 * MROWS * COUT_T * 4           # resident output block
           + (2 << 20))                       # Mosaic internal headroom
    vmem_limit = int(min(max(int(est * 1.2), 16 * 2**20),
                         max(40 * 2**20, est + (4 << 20))))

    cost = pl.CostEstimate(
        flops=int(2 * N * OH * OW * KH * KW * Cin * Cout),
        transcendentals=int(N * Cout),
        bytes_accessed=int(x_main.size) * in_bytes + int(x_halo.size) * in_bytes
                       + int(w_kernel.size) * in_bytes + int(G * MROWS * Cout_p * 4))

    out = pl.pallas_call(
        kernel,
        out_shape=jax.ShapeDtypeStruct((G, MROWS, Cout_p), jnp.float32),
        grid_spec=pltpu.PrefetchScalarGridSpec(
            num_scalar_prefetch=0,
            grid=(G, n_ct, n_mt),
            in_specs=[
                pl.BlockSpec((None, NR, KC8), lambda g, c, m: (g, m, 0)),
                pl.BlockSpec((None, OWP, KC8), lambda g, c, m: (g, m, 0)),
                pl.BlockSpec((2, KC8, COUT_T), lambda g, c, m: (0, 0, c)),
            ],
            out_specs=pl.BlockSpec((None, MROWS, COUT_T),
                                   lambda g, c, m: (g, 0, c)),
        ),
        compiler_params=pltpu.CompilerParams(
            dimension_semantics=("parallel", "parallel", "arbitrary"),
            vmem_limit_bytes=vmem_limit),
        cost_estimate=cost,
    )(x_main, x_halo, w_kernel)

    # Drop junk rows/cols/channels, restore NCHW (interface plumbing only).
    out = out.reshape(N, GE, OWP, Cout_p)[:, :OH, :OW, :Cout]
    return jnp.transpose(out, (0, 3, 1, 2))


# ---------------------------------------------------------------------------
# Pure-JAX reference (correctness check only; same bf16 conv operands).
# ---------------------------------------------------------------------------
def down_reference(x_nchw, w_sn, *, compute_dtype=jnp.bfloat16):
    y = lax.conv_general_dilated(
        x_nchw.astype(compute_dtype), w_sn.astype(compute_dtype),
        window_strides=(STRIDE, STRIDE),
        padding=((PAD, PAD), (PAD, PAD)),
        dimension_numbers=("NCHW", "OIHW", "NCHW"),
        preferred_element_type=jnp.float32)
    mean = y.mean(axis=(2, 3), keepdims=True)
    var = ((y - mean) ** 2).mean(axis=(2, 3), keepdims=True)
    yn = (y - mean) * lax.rsqrt(var + EPS_IN)
    return jnp.where(yn > 0, yn, LRELU_SLOPE * yn)


def _check(N, Cin, H, W, Cout, key):
    k_x, k_w, k_u = jax.random.split(key, 3)
    x = jax.random.normal(k_x, (N, Cin, H, W), dtype=jnp.float32)
    w = jax.random.normal(k_w, (Cout, Cin, KH, KW), dtype=jnp.float32) * 0.1
    w_sn = spectral_normalize(w, k_u, n_power_iterations=1)

    out = jax.block_until_ready(down_forward(x, w_sn, compute_dtype=jnp.bfloat16))
    ref = down_reference(x, w_sn, compute_dtype=jnp.bfloat16)
    assert out.shape == (N, Cout, H // 2, W // 2), out.shape
    max_err = float(jnp.max(jnp.abs(out - ref)))
    assert np.allclose(np.asarray(out), np.asarray(ref), atol=3e-3, rtol=3e-3), max_err
    return max_err


if __name__ == "__main__":
    key = jax.random.PRNGKey(0)
    k1, k2, k3 = jax.random.split(key, 3)

    _check(2, 4, 16, 16, 8, k1)     # small-image path, G=2, junk-column mask
    _check(4, 4, 16, 16, 8, k2)     # batch-folded path (NB=2 in one matmul)
    _check(1, 2, 128, 128, 8, k3)   # row-tiled path (n_mt>1, halo side input)

    print("KERNEL_OK")
</pallas_src>

<mosaic_0001>
module attributes {stable_mosaic.version = 11 : i64} {
  func.func @kernel(%arg0: i32, %arg1: i32, %arg2: i32, %arg3: memref<1x144x32xbf16, #tpu.memory_space<vmem>>, %arg4: memref<1x16x32xbf16, #tpu.memory_space<vmem>>, %arg5: memref<2x32x128xbf16, #tpu.memory_space<vmem>>, %arg6: memref<1x144x128xf32, #tpu.memory_space<vmem>>) attributes {dimension_semantics = [#tpu.dimension_semantics<parallel>, #tpu.dimension_semantics<parallel>, #tpu.dimension_semantics<arbitrary>], iteration_bounds = array<i64: 2, 1, 1>, scalar_prefetch = 0 : i64, scratch_operands = 0 : i64, tpu.core_type = #tpu.core_type<tc>, window_params = [{transform_indices = @transform_0, window_bounds = array<i64: 1, 144, 32>}, {transform_indices = @transform_1, window_bounds = array<i64: 1, 16, 32>}, {transform_indices = @transform_2, window_bounds = array<i64: 2, 32, 128>}, {transform_indices = @transform_3, window_bounds = array<i64: 1, 144, 128>}]} {
    %c144_i32 = arith.constant 144 : i32
    %0 = arith.muli %arg2, %c144_i32 : i32
    %1 = tpu.assume_multiple %0, 16 : i32
    %c0 = arith.constant 0 : index
    %c0_0 = arith.constant 0 : index
    %c0_1 = arith.constant 0 : index
    %2 = vector.load %arg5[%c0, %c0_0, %c0_1] : memref<2x32x128xbf16, #tpu.memory_space<vmem>>, vector<1x32x128xbf16>
    %3 = vector.shape_cast %2 : vector<1x32x128xbf16> to vector<32x128xbf16>
    %c1 = arith.constant 1 : index
    %c0_2 = arith.constant 0 : index
    %c0_3 = arith.constant 0 : index
    %4 = vector.load %arg5[%c1, %c0_2, %c0_3] : memref<2x32x128xbf16, #tpu.memory_space<vmem>>, vector<1x32x128xbf16>
    %5 = vector.shape_cast %4 : vector<1x32x128xbf16> to vector<32x128xbf16>
    %c0_4 = arith.constant 0 : index
    %c0_5 = arith.constant 0 : index
    %c0_6 = arith.constant 0 : index
    %6 = vector.load %arg3[%c0_4, %c0_5, %c0_6] : memref<1x144x32xbf16, #tpu.memory_space<vmem>>, vector<1x128x32xbf16>
    %7 = vector.shape_cast %6 : vector<1x128x32xbf16> to vector<128x32xbf16>
    %cst = arith.constant dense<0.000000e+00> : vector<128x128xf32>
    %8 = tpu.matmul %7, %3, %cst {dimension_numbers = #tpu.dot_dimension_numbers<[1], [0], [0], [1], [0, 0, 1, 1], [], []>} : vector<128x32xbf16>, vector<32x128xbf16>, vector<128x128xf32> -> vector<128x128xf32>
    %c0_7 = arith.constant 0 : index
    %c16 = arith.constant 16 : index
    %c0_8 = arith.constant 0 : index
    %9 = vector.load %arg3[%c0_7, %c16, %c0_8] : memref<1x144x32xbf16, #tpu.memory_space<vmem>>, vector<1x128x32xbf16>
    %10 = vector.shape_cast %9 : vector<1x128x32xbf16> to vector<128x32xbf16>
    %cst_9 = arith.constant dense<0.000000e+00> : vector<128x128xf32>
    %11 = tpu.matmul %10, %5, %cst_9 {dimension_numbers = #tpu.dot_dimension_numbers<[1], [0], [0], [1], [0, 0, 1, 1], [], []>} : vector<128x32xbf16>, vector<32x128xbf16>, vector<128x128xf32> -> vector<128x128xf32>
    %12 = arith.addf %8, %11 : vector<128x128xf32>
    %c0_10 = arith.constant 0 : index
    %c128 = arith.constant 128 : index
    %c0_11 = arith.constant 0 : index
    %13 = vector.load %arg3[%c0_10, %c128, %c0_11] : memref<1x144x32xbf16, #tpu.memory_space<vmem>>, vector<1x16x32xbf16>
    %14 = vector.shape_cast %13 : vector<1x16x32xbf16> to vector<16x32xbf16>
    %cst_12 = arith.constant dense<0.000000e+00> : vector<16x128xf32>
    %15 = tpu.matmul %14, %3, %cst_12 {dimension_numbers = #tpu.dot_dimension_numbers<[1], [0], [0], [1], [0, 0, 1, 1], [], []>} : vector<16x32xbf16>, vector<32x128xbf16>, vector<16x128xf32> -> vector<16x128xf32>
    %c0_13 = arith.constant 0 : index
    %c0_14 = arith.constant 0 : index
    %c0_15 = arith.constant 0 : index
    %16 = vector.load %arg4[%c0_13, %c0_14, %c0_15] : memref<1x16x32xbf16, #tpu.memory_space<vmem>>, vector<1x16x32xbf16>
    %17 = vector.shape_cast %16 : vector<1x16x32xbf16> to vector<16x32xbf16>
    %cst_16 = arith.constant dense<0.000000e+00> : vector<16x128xf32>
    %18 = tpu.matmul %17, %5, %cst_16 {dimension_numbers = #tpu.dot_dimension_numbers<[1], [0], [0], [1], [0, 0, 1, 1], [], []>} : vector<16x32xbf16>, vector<32x128xbf16>, vector<16x128xf32> -> vector<16x128xf32>
    %19 = arith.addf %15, %18 : vector<16x128xf32>
    %c0_17 = arith.constant 0 : index
    %20 = arith.index_cast %1 : i32 to index
    %c0_18 = arith.constant 0 : index
    %21 = vector.load %arg6[%c0_17, %20, %c0_18] : memref<1x144x128xf32, #tpu.memory_space<vmem>>, vector<1x128x128xf32>
    %22 = vector.shape_cast %21 : vector<1x128x128xf32> to vector<128x128xf32>
    %23 = vector.shape_cast %12 : vector<128x128xf32> to vector<1x128x128xf32>
    tpu.vector_store %arg6[%c0_17, %20, %c0_18], %23 {strides = array<i32>} : memref<1x144x128xf32, #tpu.memory_space<vmem>>, vector<1x128x128xf32>,
    %c128_i32 = arith.constant 128 : i32
    %24 = arith.addi %1, %c128_i32 : i32
    %25 = tpu.assume_multiple %24, 16 : i32
    %c0_19 = arith.constant 0 : index
    %26 = arith.index_cast %25 : i32 to index
    %c0_20 = arith.constant 0 : index
    %27 = vector.load %arg6[%c0_19, %26, %c0_20] : memref<1x144x128xf32, #tpu.memory_space<vmem>>, vector<1x16x128xf32>
    %28 = vector.shape_cast %27 : vector<1x16x128xf32> to vector<16x128xf32>
    %29 = vector.shape_cast %19 : vector<16x128xf32> to vector<1x16x128xf32>
    tpu.vector_store %arg6[%c0_19, %26, %c0_20], %29 {strides = array<i32>} : memref<1x144x128xf32, #tpu.memory_space<vmem>>, vector<1x16x128xf32>,
    %c0_i32 = arith.constant 0 : i32
    %30 = arith.cmpi eq, %arg2, %c0_i32 : i32
    %31 = arith.extui %30 : i1 to i32
    %c0_i32_21 = arith.constant 0 : i32
    %32 = arith.cmpi ne, %31, %c0_i32_21 : i32
    scf.if %32 {
      %33 = tpu.iota {dimensions = array<i32: 0>} : vector<128x1xi32>
      %c16_i32 = arith.constant 16 : i32
      %c0_i32_22 = arith.constant 0 : i32
      %34 = arith.cmpi eq, %c16_i32, %c0_i32_22 : i32
      %c1_i32 = arith.constant 1 : i32
      %35 = arith.select %34, %c1_i32, %c16_i32 : i32
      %36 = vector.broadcast %35 : i32 to vector<128x1xi32>
      %37 = arith.remsi %33, %36 : vector<128x1xi32>
      %c0_i32_23 = arith.constant 0 : i32
      %38 = vector.broadcast %c0_i32_23 : i32 to vector<128x1xi32>
      %39 = arith.cmpi ne, %37, %38 : vector<128x1xi32>
      %c0_i32_24 = arith.constant 0 : i32
      %40 = vector.broadcast %c0_i32_24 : i32 to vector<128x1xi32>
      %41 = arith.cmpi slt, %37, %40 : vector<128x1xi32>
      %c0_i32_25 = arith.constant 0 : i32
      %42 = arith.cmpi slt, %35, %c0_i32_25 : i32
      %43 = vector.broadcast %42 : i1 to vector<128x1xi1>
      %44 = vector.broadcast %43 : vector<128x1xi1> to vector<128x1xi1>
      %45 = arith.xori %41, %44 : vector<128x1xi1>
      %46 = arith.andi %45, %39 : vector<128x1xi1>
      %47 = vector.broadcast %35 : i32 to vector<128x1xi32>
      %48 = arith.addi %37, %47 : vector<128x1xi32>
      %49 = arith.select %46, %48, %37 : vector<128x1xi1>, vector<128x1xi32>
      %c8_i32 = arith.constant 8 : i32
      %50 = vector.broadcast %c8_i32 : i32 to vector<128x1xi32>
      %51 = arith.cmpi slt, %49, %50 : vector<128x1xi32>
      %52 = arith.extui %51 : vector<128x1xi1> to vector<128x1xi32>
      %53 = arith.sitofp %52 : vector<128x1xi32> to vector<128x1xf32>
      %cst_26 = arith.constant 0.000000e+00 : f32
      %54 = vector.broadcast %cst_26 : f32 to vector<1x128xf32>
      %c0_i32_27 = arith.constant 0 : i32
      %c128_i32_28 = arith.constant 128 : i32
      %55 = arith.muli %c0_i32_27, %c128_i32_28 : i32
      %c0_i32_29 = arith.constant 0 : i32
      %56 = arith.addi %c0_i32_29, %55 : i32
      %57 = tpu.assume_multiple %56, 16 : i32
      %c0_30 = arith.constant 0 : index
      %58 = arith.index_cast %57 : i32 to index
      %c0_31 = arith.constant 0 : index
      %59 = vector.load %arg6[%c0_30, %58, %c0_31] : memref<1x144x128xf32, #tpu.memory_space<vmem>>, vector<1x128x128xf32>
      %60 = vector.shape_cast %59 : vector<1x128x128xf32> to vector<128x128xf32>
      %61 = vector.broadcast %53 : vector<128x1xf32> to vector<128x128xf32>
      %62 = arith.mulf %60, %61 : vector<128x128xf32>
      %cst_32 = arith.constant dense<0.000000e+00> : vector<128xf32>
      %63 = vector.multi_reduction <add>, %62, %cst_32 [0] : vector<128x128xf32> to vector<128xf32>
      %64 = vector.shape_cast %63 : vector<128xf32> to vector<1x128xf32>
      %65 = arith.addf %54, %64 : vector<1x128xf32>
      %c1_i32_33 = arith.constant 1 : i32
      %cst_34 = arith.constant 1.562500e-02 : f32
      %66 = vector.broadcast %cst_34 : f32 to vector<1x128xf32>
      %67 = arith.mulf %65, %66 : vector<1x128xf32>
      %cst_35 = arith.constant 0.000000e+00 : f32
      %68 = vector.broadcast %cst_35 : f32 to vector<1x128xf32>
      %c0_i32_36 = arith.constant 0 : i32
      %c128_i32_37 = arith.constant 128 : i32
      %69 = arith.muli %c0_i32_36, %c128_i32_37 : i32
      %c0_i32_38 = arith.constant 0 : i32
      %70 = arith.addi %c0_i32_38, %69 : i32
      %71 = tpu.assume_multiple %70, 16 : i32
      %c0_39 = arith.constant 0 : index
      %72 = arith.index_cast %71 : i32 to index
      %c0_40 = arith.constant 0 : index
      %73 = vector.load %arg6[%c0_39, %72, %c0_40] : memref<1x144x128xf32, #tpu.memory_space<vmem>>, vector<1x128x128xf32>
      %74 = vector.shape_cast %73 : vector<1x128x128xf32> to vector<128x128xf32>
      %75 = vector.broadcast %67 : vector<1x128xf32> to vector<128x128xf32>
      %76 = arith.subf %74, %75 : vector<128x128xf32>
      %77 = vector.broadcast %53 : vector<128x1xf32> to vector<128x128xf32>
      %78 = arith.mulf %76, %77 : vector<128x128xf32>
      %79 = arith.mulf %78, %78 : vector<128x128xf32>
      %cst_41 = arith.constant dense<0.000000e+00> : vector<128xf32>
      %80 = vector.multi_reduction <add>, %79, %cst_41 [0] : vector<128x128xf32> to vector<128xf32>
      %81 = vector.shape_cast %80 : vector<128xf32> to vector<1x128xf32>
      %82 = arith.addf %68, %81 : vector<1x128xf32>
      %c1_i32_42 = arith.constant 1 : i32
      %cst_43 = arith.constant 1.562500e-02 : f32
      %83 = vector.broadcast %cst_43 : f32 to vector<1x128xf32>
      %84 = arith.mulf %82, %83 : vector<1x128xf32>
      %cst_44 = arith.constant 9.99999974E-6 : f32
      %85 = vector.broadcast %cst_44 : f32 to vector<1x128xf32>
      %86 = arith.addf %84, %85 : vector<1x128xf32>
      %87 = math.rsqrt %86 : vector<1x128xf32>
      %88 = arith.mulf %67, %87 : vector<1x128xf32>
      %c0_i32_45 = arith.constant 0 : i32
      %c128_i32_46 = arith.constant 128 : i32
      %89 = arith.muli %c0_i32_45, %c128_i32_46 : i32
      %c0_i32_47 = arith.constant 0 : i32
      %90 = arith.addi %c0_i32_47, %89 : i32
      %91 = tpu.assume_multiple %90, 16 : i32
      %c0_48 = arith.constant 0 : index
      %92 = arith.index_cast %91 : i32 to index
      %c0_49 = arith.constant 0 : index
      %93 = vector.load %arg6[%c0_48, %92, %c0_49] : memref<1x144x128xf32, #tpu.memory_space<vmem>>, vector<1x128x128xf32>
      %94 = vector.shape_cast %93 : vector<1x128x128xf32> to vector<128x128xf32>
      %95 = vector.broadcast %87 : vector<1x128xf32> to vector<128x128xf32>
      %96 = arith.mulf %94, %95 : vector<128x128xf32>
      %97 = vector.broadcast %88 : vector<1x128xf32> to vector<128x128xf32>
      %98 = arith.subf %96, %97 : vector<128x128xf32>
      %cst_50 = arith.constant 2.000000e-01 : f32
      %99 = vector.broadcast %cst_50 : f32 to vector<128x128xf32>
      %100 = arith.mulf %99, %98 : vector<128x128xf32>
      %101 = arith.maximumf %98, %100 : vector<128x128xf32>
      %c0_51 = arith.constant 0 : index
      %102 = arith.index_cast %91 : i32 to index
      %c0_52 = arith.constant 0 : index
      %103 = vector.load %arg6[%c0_51, %102, %c0_52] : memref<1x144x128xf32, #tpu.memory_space<vmem>>, vector<1x128x128xf32>
      %104 = vector.shape_cast %103 : vector<1x128x128xf32> to vector<128x128xf32>
      %105 = vector.shape_cast %101 : vector<128x128xf32> to vector<1x128x128xf32>
      tpu.vector_store %arg6[%c0_51, %102, %c0_52], %105 {strides = array<i32>} : memref<1x144x128xf32, #tpu.memory_space<vmem>>, vector<1x128x128xf32>,
      %c1_i32_53 = arith.constant 1 : i32
    } else {
    }
    return
  }
  func.func @transform_0(%arg0: i32, %arg1: i32, %arg2: i32) -> (i32, i32, i32) {
    %c0_i32 = arith.constant 0 : i32
    %c0_i32_0 = arith.constant 0 : i32
    return %arg0, %arg2, %c0_i32 : i32, i32, i32
  }
  func.func @transform_1(%arg0: i32, %arg1: i32, %arg2: i32) -> (i32, i32, i32) {
    %c0_i32 = arith.constant 0 : i32
    %c0_i32_0 = arith.constant 0 : i32
    return %arg0, %arg2, %c0_i32 : i32, i32, i32
  }
  func.func @transform_2(%arg0: i32, %arg1: i32, %arg2: i32) -> (i32, i32, i32) {
    %c0_i32 = arith.constant 0 : i32
    %c0_i32_0 = arith.constant 0 : i32
    %c0_i32_1 = arith.constant 0 : i32
    return %c0_i32, %c0_i32_0, %arg1 : i32, i32, i32
  }
  func.func @transform_3(%arg0: i32, %arg1: i32, %arg2: i32) -> (i32, i32, i32) {
    %c0_i32 = arith.constant 0 : i32
    %c0_i32_0 = arith.constant 0 : i32
    return %arg0, %c0_i32, %arg1 : i32, i32, i32
  }
}

</mosaic_0001>

<llo_original>
// kernel: tpu_custom_call.1
$region0: #{tpu_custom_call.1}
  #allocation0 [shape = 'u32[]', space=smem, size = 0x4, offset = 0x4, fixed_abs, tag = 'smem constant byte address 0x4 - core index']
  #allocation1 [shape = 'u32[144,128]{1,0:T(1,128)}', space=vmem, size = 0x12000, scoped, tag = 'internal scratch']
  %s0 = inlined_call_operand.vmem [shape: bf16[2,144,32], index: 0, kind: input, shape index: {}]
  %s1 = inlined_call_operand.vmem [shape: bf16[2,16,32], index: 1, kind: input, shape index: {}]
  %s2 = inlined_call_operand.vmem [shape: bf16[2,32,128], index: 2, kind: input, shape index: {}]
  %s3 = inlined_call_operand.hbm [shape: f32[2,144,128], index: 3, kind: output, shape index: {}]
  %s4 = sld [smem:[#allocation0]]
  $region49: #{tpu_custom_call.1} parent=0
    _
  %s6 = ssub.s32 1, %s4
  %s7 = scalar_select 0, %s6, %s4
  $region1: #{tpu_custom_call.1} parent=0
    #allocation2 [shape = 'u8[147456]{0}', space=vmem, size = 0x24000, scoped, tag = 'output window, operand 0']
    #allocation3 [shape = 's32[2]{0}', space=sflag, size = 0x8, scoped, tag = 'scoped memory for tpu_custom_call.1']
    %8 = vsyncpa [#allocation3], 0
    %s9 = scalar_lea.sflag [#allocation3], 1
    %10 = vsyncpa %s9, 0
    loop: start=0, step=1, limit=4
    $region2: #{tpu_custom_call.1} parent=1 // loop_pre_header
      _
    $region3: #{tpu_custom_call.1} parent=1 // loop_header
      %s12 = sphi 0, %s16
      %p13 = scmp.ge.s32.totalorder %s12, 4
      %s19 = sphi 0, %s38
      %s20 = sphi 0, %s34
      %s21 = sphi 0, %s30
      %s22 = sphi 0, %s19
      %s23 = sphi 0, %s20
      %s24 = sphi 0, %s21
      %s25 = sphi 0, %s22
      %s26 = sphi 0, %s23
      %s27 = sphi 0, %s24
      %s43 = sphi 0, %s45
      %s46 = sphi 0, %s43
      %s47 = sphi 0, %s46
      %s63 = sphi 0, %s47
      %s71 = sphi 0, %s73
      %s74 = sphi 0, %s71
      %s75 = sphi 0, %s74
      %s91 = sphi 0, %s75
      %s97 = sphi 0, %s99
      %s100 = sphi 0, %s97
      %s101 = sphi 0, %s100
      %s117 = sphi 0, %s101
      %s125 = sphi 0, %s127
      %s128 = sphi 0, %s125
      %s129 = sphi 0, %s128
      %s145 = sphi 0, %s129
    $region4: #{tpu_custom_call.1} parent=1 // loop_header_branch
      %15 = sbr.rel (%p13) target = $region8
    $region5: #{tpu_custom_call.1} parent=1 // loop_body
      %s17 = ssub.s32 %s12, 1
      %s18 = ssub.s32 %s12, 2
      %s28 = sadd.s32 1, %s21
      %p29 = scmp.ge.s32.totalorder %s28, 1
      %s30 = scalar_select %p29, 0, %s28
      %s31 = sadd.s32 1, %s20
      %s32 = scalar_select %p29, %s31, %s20
      %p33 = scmp.ge.s32.totalorder %s32, 1
      %s34 = scalar_select %p33, 0, %s32
      %s35 = sadd.s32 1, %s19
      %s36 = scalar_select %p33, %s35, %s19
      %p37 = scmp.ge.s32.totalorder %s36, 2
      %s38 = scalar_select %p37, 0, %s36
      %s39 = ssub.s32 %s19, %s38
      %s40 = ssub.s32 %s21, %s30
      %s41 = sor.u32 %s39, %s40
      %p42 = scmp.eq.s32.totalorder %s41, 0
      %s44 = sadd.s32 %s43, 1
      %s45 = scalar_select %p42, %s43, %s44
      %p48 = pneg %p42
      %p49 = scmp.eq.s32.totalorder %s12, 1
      %p50 = por %p48, %p49
      %p51 = scmp.ne.s32.totalorder %s43, %s46
      %p52 = scmp.eq.s32.totalorder %s12, 0
      %p53 = por %p51, %p52
      %p54 = scmp.ne.s32.totalorder %s43, %s46
      %p55 = scmp.eq.s32.totalorder %s17, 1
      %p56 = por %p54, %p55
      %p57 = scmp.ne.s32.totalorder %s46, %s47
      %p58 = scmp.eq.s32.totalorder %s17, 0
      %p59 = por %p57, %p58
      %p60 = scmp.ne.s32.totalorder %s46, %s47
      %p61 = scmp.eq.s32.totalorder %s18, 1
      %p62 = por %p60, %p61
      %p64 = scmp.ne.s32.totalorder %s47, %s63
      %p65 = scmp.eq.s32.totalorder %s18, 0
      %p66 = por %p64, %p65
      %s67 = ssub.s32 %s19, %s38
      %s68 = ssub.s32 %s21, %s30
      %s69 = sor.u32 %s67, %s68
      %p70 = scmp.eq.s32.totalorder %s69, 0
      %s72 = sadd.s32 %s71, 1
      %s73 = scalar_select %p70, %s71, %s72
      %p76 = pneg %p70
      %p77 = scmp.eq.s32.totalorder %s12, 1
      %p78 = por %p76, %p77
      %p79 = scmp.ne.s32.totalorder %s71, %s74
      %p80 = scmp.eq.s32.totalorder %s12, 0
      %p81 = por %p79, %p80
      %p82 = scmp.ne.s32.totalorder %s71, %s74
      %p83 = scmp.eq.s32.totalorder %s17, 1
      %p84 = por %p82, %p83
      %p85 = scmp.ne.s32.totalorder %s74, %s75
      %p86 = scmp.eq.s32.totalorder %s17, 0
      %p87 = por %p85, %p86
      %p88 = scmp.ne.s32.totalorder %s74, %s75
      %p89 = scmp.eq.s32.totalorder %s18, 1
      %p90 = por %p88, %p89
      %p92 = scmp.ne.s32.totalorder %s75, %s91
      %p93 = scmp.eq.s32.totalorder %s18, 0
      %p94 = por %p92, %p93
      %s95 = ssub.s32 %s20, %s34
      %p96 = scmp.eq.s32.totalorder %s95, 0
      %s98 = sadd.s32 %s97, 1
      %s99 = scalar_select %p96, %s97, %s98
      %p102 = pneg %p96
      %p103 = scmp.eq.s32.totalorder %s12, 1
      %p104 = por %p102, %p103
      %p105 = scmp.ne.s32.totalorder %s97, %s100
      %p106 = scmp.eq.s32.totalorder %s12, 0
      %p107 = por %p105, %p106
      %p108 = scmp.ne.s32.totalorder %s97, %s100
      %p109 = scmp.eq.s32.totalorder %s17, 1
      %p110 = por %p108, %p109
      %p111 = scmp.ne.s32.totalorder %s100, %s101
      %p112 = scmp.eq.s32.totalorder %s17, 0
      %p113 = por %p111, %p112
      %p114 = scmp.ne.s32.totalorder %s100, %s101
      %p115 = scmp.eq.s32.totalorder %s18, 1
      %p116 = por %p114, %p115
      %p118 = scmp.ne.s32.totalorder %s101, %s117
      %p119 = scmp.eq.s32.totalorder %s18, 0
      %p120 = por %p118, %p119
      %s121 = ssub.s32 %s19, %s38
      %s122 = ssub.s32 %s20, %s34
      %s123 = sor.u32 %s121, %s122
      %p124 = scmp.eq.s32.totalorder %s123, 0
      %s126 = sadd.s32 %s125, 1
      %s127 = scalar_select %p124, %s125, %s126
      %p130 = pneg %p124
      %p131 = scmp.eq.s32.totalorder %s12, 1
      %p132 = por %p130, %p131
      %p133 = scmp.ne.s32.totalorder %s125, %s128
      %p134 = scmp.eq.s32.totalorder %s12, 0
      %p135 = por %p133, %p134
      %p136 = scmp.ne.s32.totalorder %s125, %s128
      %p137 = scmp.eq.s32.totalorder %s17, 1
      %p138 = por %p136, %p137
      %p139 = scmp.ne.s32.totalorder %s128, %s129
      %p140 = scmp.eq.s32.totalorder %s17, 0
      %p141 = por %p139, %p140
      %p142 = scmp.ne.s32.totalorder %s128, %s129
      %p143 = scmp.eq.s32.totalorder %s18, 1
      %p144 = por %p142, %p143
      %p146 = scmp.ne.s32.totalorder %s129, %s145
      %p147 = scmp.eq.s32.totalorder %s18, 0
      %p148 = por %p146, %p147
      %p149 = scmp.le.s32.totalorder 1, %s12
      %p150 = scmp.lt.s32.totalorder %s12, 3
      %p151 = pnand %p149, %p150
      %p152 = pneg %p151
      // Predicated region
      $region9: #{tpu_custom_call.1} parent=5 // pred_check
        _
      $region10: #{tpu_custom_call.1} parent=5 // pred_check_branch
        %154 = sbr.rel (%p151) target = $region12
      $region11: #{tpu_custom_call.1} parent=5 // pred_region
        %s155 = ssub.s32 %s12, 1
        // Predicated region
        $region13: #{tpu_custom_call.1} parent=11 // pred_check
          %p156 = pneg %p113
        $region14: #{tpu_custom_call.1} parent=11 // pred_check_branch
          %158 = sbr.rel (%p156) target = $region16
        $region15: #{tpu_custom_call.1} parent=11 // pred_region
          %p159 = scmp.lt.s32.totalorder %s23, 0
          %s160 = scalar_select %p159, %s23, 0
          %s161 = smul.addr %s160, 4
          %s162 = scalar_lea.vmem %s2, %s161
        $region16: #{tpu_custom_call.1} parent=11 // pred_fallthru
          _
      $region12: #{tpu_custom_call.1} parent=5 // pred_fallthru
        _
      %p163 = scmp.lt.s32.totalorder %s12, 2
      // Predicated region
      $region17: #{tpu_custom_call.1} parent=5 // pred_check
        %p164 = pneg %p163
      $region18: #{tpu_custom_call.1} parent=5 // pred_check_branch
        %166 = sbr.rel (%p164) target = $region20
      $region19: #{tpu_custom_call.1} parent=5 // pred_region
        // Predicated region
        $region21: #{tpu_custom_call.1} parent=19 // pred_check
          %p167 = pneg %p53
        $region22: #{tpu_custom_call.1} parent=19 // pred_check_branch
          %169 = sbr.rel (%p167) target = $region24
        $region23: #{tpu_custom_call.1} parent=19 // pred_region
          %s170 = smul.u32 18, %s21
          %p171 = scmp.lt.s32.totalorder %s19, 1
          %s172 = scalar_select %p171, %s19, 1
          %p173 = scmp.lt.s32.totalorder %s170, 17
          %s174 = scalar_select %p173, %s170, 17
          %s175 = smul.addr %s172, 18
          %s176 = sadd.s32 %s174, %s175
          %s177 = smul.addr %s176, 4
          %s178 = scalar_lea.vmem %s0, %s177
          %s179 = smul.u32 18, %s21
        $region24: #{tpu_custom_call.1} parent=19 // pred_fallthru
          _
        // Predicated region
        $region25: #{tpu_custom_call.1} parent=19 // pred_check
          %p180 = pneg %p81
        $region26: #{tpu_custom_call.1} parent=19 // pred_check_branch
          %182 = sbr.rel (%p180) target = $region28
        $region27: #{tpu_custom_call.1} parent=19 // pred_region
          %s183 = smul.u32 2, %s21
          %p184 = scmp.lt.s32.totalorder %s19, 1
          %s185 = scalar_select %p184, %s19, 1
          %p186 = scmp.lt.s32.totalorder %s183, 1
          %s187 = scalar_select %p186, %s183, 1
          %s188 = smul.addr %s185, 2
          %s189 = sadd.s32 %s187, %s188
          %s190 = smul.addr %s189, 4
          %s191 = scalar_lea.vmem %s1, %s190
          %s192 = smul.u32 2, %s21
        $region28: #{tpu_custom_call.1} parent=19 // pred_fallthru
          _
      $region20: #{tpu_custom_call.1} parent=5 // pred_fallthru
        _
      %p193 = scmp.le.s32.totalorder 1, %s12
      %p194 = scmp.lt.s32.totalorder %s12, 3
      %p195 = pnand %p193, %p194
      %p196 = pneg %p195
      // Predicated region
      $region29: #{tpu_custom_call.1} parent=5 // pred_check
        _
      $region30: #{tpu_custom_call.1} parent=5 // pred_check_branch
        %198 = sbr.rel (%p195) target = $region32
      $region31: #{tpu_custom_call.1} parent=5 // pred_region
        %s199 = ssub.s32 %s12, 1
        %s200 = smul.u32 18, %s24
        %p201 = scmp.lt.s32.totalorder %s22, 1
        %s202 = scalar_select %p201, %s22, 1
        %p203 = scmp.lt.s32.totalorder %s200, 17
        %s204 = scalar_select %p203, %s200, 17
        %s205 = smul.addr %s202, 18
        %s206 = sadd.s32 %s204, %s205
        %s207 = smul.addr %s206, 4
        %s208 = scalar_lea.vmem %s0, %s207
        %p209 = pneg %p59
        %p210 = pneg %p56
        %s211 = smul.u32 2, %s24
        %p212 = scmp.lt.s32.totalorder %s22, 1
        %s213 = scalar_select %p212, %s22, 1
        %p214 = scmp.lt.s32.totalorder %s211, 1
        %s215 = scalar_select %p214, %s211, 1
        %s216 = smul.addr %s213, 2
        %s217 = sadd.s32 %s215, %s216
        %s218 = smul.addr %s217, 4
        %s219 = scalar_lea.vmem %s1, %s218
        %p220 = pneg %p87
        %p221 = pneg %p84
        %p222 = scmp.lt.s32.totalorder %s23, 0
        %s223 = scalar_select %p222, %s23, 0
        %s224 = smul.addr %s223, 4
        %s225 = scalar_lea.vmem %s2, %s224
        %p226 = pneg %p113
        %p227 = pneg %p110
        %p228 = pneg %p141
        %p229 = pneg %p138
        %s230 = sand.u32 %s128, 1
        %s231 = scalar_lea.sflag [#allocation3], %s230
        %s232 = sand.u32 %s128, 1
        %s233 = smul.addr %s232, 144
        %s234 = scalar_lea.vmem [#allocation2], %s233
        %s235 = smul.u32 18, %s24
        %p236 = scmp.lt.s32.totalorder %s22, 1
        %s237 = scalar_select %p236, %s22, 1
        %p238 = scmp.lt.s32.totalorder %s235, 17
        %s239 = scalar_select %p238, %s235, 17
        %s240 = smul.addr %s237, 18
        %s241 = sadd.s32 %s239, %s240
        %s242 = smul.addr %s241, 4
        %s243 = scalar_lea.vmem %s0, %s242
        %s244 = smul.u32 18, %s24
        %s245 = smul.u32 2, %s24
        %p246 = scmp.lt.s32.totalorder %s22, 1
        %s247 = scalar_select %p246, %s22, 1
        %p248 = scmp.lt.s32.totalorder %s245, 1
        %s249 = scalar_select %p248, %s245, 1
        %s250 = smul.addr %s247, 2
        %s251 = sadd.s32 %s249, %s250
        %s252 = smul.addr %s251, 4
        %s253 = scalar_lea.vmem %s1, %s252
        %s254 = smul.u32 2, %s24
        %p255 = scmp.lt.s32.totalorder %s23, 0
        %s256 = scalar_select %p255, %s23, 0
        %s257 = smul.addr %s256, 4
        %s258 = scalar_lea.vmem %s2, %s257
        %s260 = smul.u32 %s24, 144
        %v261 = vld [vmem:[%s258] sm:$0xf]
        %v262 = vld [vmem:[%s258 + $0x4] sm:$0xf]
        %v263 = vld [vmem:[%s258 + $0x8] sm:$0xf]
        %v264 = vld [vmem:[%s258 + $0xc] sm:$0xf]
        %s265 = scalar_lea.vmem %s258, 16
        %v266 = vld [vmem:[%s265] sm:$0xf]
        %v267 = vld [vmem:[%s265 + $0x4] sm:$0xf]
        %v268 = vld [vmem:[%s265 + $0x8] sm:$0xf]
        %v269 = vld [vmem:[%s265 + $0xc] sm:$0xf]
        %v270 = vld [vmem:[%s243] sm:$0xf]
        %v271 = vld [vmem:[%s243 + $0x4] sm:$0xf]
        %v272 = vld [vmem:[%s243 + $0x8] sm:$0xf]
        %v273 = vld [vmem:[%s243 + $0xc] sm:$0xf]
        %v274 = vld [vmem:[%s243 + $0x10] sm:$0xf]
        %v275 = vld [vmem:[%s243 + $0x14] sm:$0xf]
        %v276 = vld [vmem:[%s243 + $0x18] sm:$0xf]
        %v277 = vld [vmem:[%s243 + $0x1c] sm:$0xf]
        %v278 = vld [vmem:[%s243 + $0x20] sm:$0xf]
        %v279 = vld [vmem:[%s243 + $0x24] sm:$0xf]
        %v280 = vld [vmem:[%s243 + $0x28] sm:$0xf]
        %v281 = vld [vmem:[%s243 + $0x2c] sm:$0xf]
        %v282 = vld [vmem:[%s243 + $0x30] sm:$0xf]
        %v283 = vld [vmem:[%s243 + $0x34] sm:$0xf]
        %v284 = vld [vmem:[%s243 + $0x38] sm:$0xf]
        %v285 = vld [vmem:[%s243 + $0x3c] sm:$0xf]
        %v286 = vld [vmem:[%s243 + $0x40] sm:$0xf]
        %v287 = vld [vmem:[%s243 + $0x44] sm:$0xf]
        %v304 = vunpack.c.l.b16 %v272
        %v305 = vunpack.c.l.b16 %v273
        %v306 = vunpack.c.l.b16 %v274
        %v307 = vunpack.c.l.b16 %v275
        %v308 = vunpack.c.l.b16 %v276
        %v309 = vunpack.c.l.b16 %v277
        %v310 = vunpack.c.l.b16 %v278
        %v311 = vunpack.c.l.b16 %v279
        %v312 = vunpack.c.l.b16 %v280
        %v313 = vunpack.c.l.b16 %v281
        %v314 = vunpack.c.l.b16 %v282
        %v315 = vunpack.c.l.b16 %v283
        %v316 = vunpack.c.l.b16 %v284
        %v317 = vunpack.c.l.b16 %v285
        %v318 = vunpack.c.l.b16 %v286
        %v319 = vunpack.c.l.b16 %v287
        %v320 = vpack.c.b16 %v305, %v304
        %v321 = vpack.c.b16 %v307, %v306
        %v322 = vpack.c.b16 %v309, %v308
        %v323 = vpack.c.b16 %v311, %v310
        %v324 = vpack.c.b16 %v313, %v312
        %v325 = vpack.c.b16 %v315, %v314
        %v326 = vpack.c.b16 %v317, %v316
        %v327 = vpack.c.b16 %v319, %v318
        %v332 = vunpack.c.l.b16 %v266
        %v333 = vunpack.c.l.b16 %v267
        %v334 = vunpack.c.l.b16 %v268
        %v335 = vunpack.c.l.b16 %v269
        %v336 = vpack.c.b16 %v333, %v332
        %v337 = vpack.c.b16 %v335, %v334
        %vm340 = vcmask 261120
        %v342 = vsel %vm340, %v320, 0
        %v345 = vsel %vm340, %v321, 0
        %v348 = vsel %vm340, %v322, 0
        %v351 = vsel %vm340, %v323, 0
        %v354 = vsel %vm340, %v324, 0
        %v357 = vsel %vm340, %v325, 0
        %v360 = vsel %vm340, %v326, 0
        %v363 = vsel %vm340, %v327, 0
        %365 = vmatprep.subr.bf16.mxu0 0
        %366 = vmatpush1.bf16.msra.mxu0 %v336
        %367 = vmatprep.subr.bf16.mxu0 0
        %368 = vmatpush1.bf16.msra.mxu0 %v337
        %369 = vmatprep.subr.bf16.mxu0 0
        %370 = vmatpush1.bf16.msra.mxu0 0
        %371 = vmatprep.subr.bf16.mxu0 0
        %372 = vmatpush1.bf16.msra.mxu0 0
        %373 = vmatprep.subr.bf16.mxu0 0
        %374 = vmatpush1.bf16.msra.mxu0 0
        %375 = vmatprep.subr.bf16.mxu0 0
        %376 = vmatpush1.bf16.msra.mxu0 0
        %377 = vmatprep.subr.bf16.mxu0 0
        %378 = vmatpush1.bf16.msra.mxu0 0
        %379 = vmatprep.subr.bf16.mxu0 0
        %380 = vmatpush1.bf16.msra.mxu0 0
        %381 = vmatprep.subr.bf16.mxu0 0
        %382 = vmatpush1.bf16.msra.mxu0 0
        %383 = vmatprep.subr.bf16.mxu0 0
        %384 = vmatpush1.bf16.msra.mxu0 0
        %385 = vmatprep.subr.bf16.mxu0 0
        %386 = vmatpush1.bf16.msra.mxu0 0
        %387 = vmatprep.subr.bf16.mxu0 0
        %388 = vmatpush1.bf16.msra.mxu0 0
        %389 = vmatprep.subr.bf16.mxu0 0
        %390 = vmatpush1.bf16.msra.mxu0 0
        %391 = vmatprep.subr.bf16.mxu0 0
        %392 = vmatpush1.bf16.msra.mxu0 0
        %393 = vmatprep.subr.bf16.mxu0 0
        %394 = vmatpush1.bf16.msra.mxu0 0
        %395 = vmatprep.subr.bf16.mxu0 0
        %396 = vmatpush1.bf16.msra.mxu0 0
        %397 = vmatprep.mubr.bf16.mxu0 0
        %398 = vmatmul.mubr.bf16.gmra.mrb[0].mxu0 %v342
        %v399 = vpop.f32.mrb[0].mxu0
        %v400 = vadd.f32 0.0, %v399
        %v401 = vpop.f32.mrb[0].mxu0
        %v402 = vpop.f32.mrb[0].mxu0
        %v403 = vadd.f32 0.0, %v402
        %v404 = vpop.f32.mrb[0].mxu0
        %405 = vmatprep.mubr.bf16.mxu0 0
        %406 = vmatmul.mubr.bf16.gmra.mrb[0].mxu0 %v345
        %v407 = vpop.f32.mrb[0].mxu0
        %v408 = vadd.f32 0.0, %v407
        %v409 = vpop.f32.mrb[0].mxu0
        %v410 = vpop.f32.mrb[0].mxu0
        %v411 = vadd.f32 0.0, %v410
        %v412 = vpop.f32.mrb[0].mxu0
        %413 = vmatprep.mubr.bf16.mxu0 0
        %414 = vmatmul.mubr.bf16.gmra.mrb[0].mxu0 %v348
        %v415 = vpop.f32.mrb[0].mxu0
        %v416 = vadd.f32 0.0, %v415
        %v417 = vpop.f32.mrb[0].mxu0
        %v418 = vpop.f32.mrb[0].mxu0
        %v419 = vadd.f32 0.0, %v418
        %v420 = vpop.f32.mrb[0].mxu0
        %421 = vmatprep.mubr.bf16.mxu0 0
        %422 = vmatmul.mubr.bf16.gmra.mrb[0].mxu0 %v351
        %v423 = vpop.f32.mrb[0].mxu0
        %v424 = vadd.f32 0.0, %v423
        %v425 = vpop.f32.mrb[0].mxu0
        %v426 = vpop.f32.mrb[0].mxu0
        %v427 = vadd.f32 0.0, %v426
        %v428 = vpop.f32.mrb[0].mxu0
        %429 = vmatprep.mubr.bf16.mxu0 0
        %430 = vmatmul.mubr.bf16.gmra.mrb[0].mxu0 %v354
        %v431 = vpop.f32.mrb[0].mxu0
        %v432 = vadd.f32 0.0, %v431
        %v433 = vpop.f32.mrb[0].mxu0
        %v434 = vpop.f32.mrb[0].mxu0
        %v435 = vadd.f32 0.0, %v434
        %v436 = vpop.f32.mrb[0].mxu0
        %437 = vmatprep.mubr.bf16.mxu0 0
        %438 = vmatmul.mubr.bf16.gmra.mrb[0].mxu0 %v357
        %v439 = vpop.f32.mrb[0].mxu0
        %v440 = vadd.f32 0.0, %v439
        %v441 = vpop.f32.mrb[0].mxu0
        %v442 = vpop.f32.mrb[0].mxu0
        %v443 = vadd.f32 0.0, %v442
        %v444 = vpop.f32.mrb[0].mxu0
        %445 = vmatprep.mubr.bf16.mxu0 0
        %446 = vmatmul.mubr.bf16.gmra.mrb[0].mxu0 %v360
        %v447 = vpop.f32.mrb[0].mxu0
        %v448 = vadd.f32 0.0, %v447
        %v449 = vpop.f32.mrb[0].mxu0
        %v450 = vpop.f32.mrb[0].mxu0
        %v451 = vadd.f32 0.0, %v450
        %v452 = vpop.f32.mrb[0].mxu0
        %453 = vmatprep.mubr.bf16.mxu0 0
        %454 = vmatmul.mubr.bf16.gmra.mrb[0].mxu0 %v363
        %v455 = vpop.f32.mrb[0].mxu0
        %v456 = vadd.f32 0.0, %v455
        %v457 = vpop.f32.mrb[0].mxu0
        %v458 = vpop.f32.mrb[0].mxu0
        %v459 = vadd.f32 0.0, %v458
        %v460 = vpop.f32.mrb[0].mxu0
        %461 = vdwg.mxu0
        %v464 = vunpack.c.l.b16 %v270
        %v465 = vunpack.c.l.b16 %v271
        %v466 = vpack.c.b16 %v465, %v464
        %v471 = vunpack.c.l.b16 %v261
        %v472 = vunpack.c.l.b16 %v262
        %v473 = vunpack.c.l.b16 %v263
        %v474 = vunpack.c.l.b16 %v264
        %v475 = vpack.c.b16 %v472, %v471
        %v476 = vpack.c.b16 %v474, %v473
        %v480 = vsel %vm340, %v466, 0
        %482 = vmatprep.subr.bf16.mxu0 0
        %483 = vmatpush1.bf16.msra.mxu0 %v475
        %484 = vmatprep.subr.bf16.mxu0 0
        %485 = vmatpush1.bf16.msra.mxu0 %v476
        %486 = vmatprep.subr.bf16.mxu0 0
        %487 = vmatpush1.bf16.msra.mxu0 0
        %488 = vmatprep.subr.bf16.mxu0 0
        %489 = vmatpush1.bf16.msra.mxu0 0
        %490 = vmatprep.subr.bf16.mxu0 0
        %491 = vmatpush1.bf16.msra.mxu0 0
        %492 = vmatprep.subr.bf16.mxu0 0
        %493 = vmatpush1.bf16.msra.mxu0 0
        %494 = vmatprep.subr.bf16.mxu0 0
        %495 = vmatpush1.bf16.msra.mxu0 0
        %496 = vmatprep.subr.bf16.mxu0 0
        %497 = vmatpush1.bf16.msra.mxu0 0
        %498 = vmatprep.subr.bf16.mxu0 0
        %499 = vmatpush1.bf16.msra.mxu0 0
        %500 = vmatprep.subr.bf16.mxu0 0
        %501 = vmatpush1.bf16.msra.mxu0 0
        %502 = vmatprep.subr.bf16.mxu0 0
        %503 = vmatpush1.bf16.msra.mxu0 0
        %504 = vmatprep.subr.bf16.mxu0 0
        %505 = vmatpush1.bf16.msra.mxu0 0
        %506 = vmatprep.subr.bf16.mxu0 0
        %507 = vmatpush1.bf16.msra.mxu0 0
        %508 = vmatprep.subr.bf16.mxu0 0
        %509 = vmatpush1.bf16.msra.mxu0 0
        %510 = vmatprep.subr.bf16.mxu0 0
        %511 = vmatpush1.bf16.msra.mxu0 0
        %512 = vmatprep.subr.bf16.mxu0 0
        %513 = vmatpush1.bf16.msra.mxu0 0
        %514 = vmatprep.mubr.bf16.mxu0 0
        %515 = vmatmul.mubr.bf16.gmra.mrb[0].mxu0 %v480
        %v516 = vpop.f32.mrb[0].mxu0
        %v517 = vadd.f32 %v400, %v516
        %v518 = vpop.f32.mrb[0].mxu0
        %v519 = vpop.f32.mrb[0].mxu0
        %v520 = vadd.f32 %v403, %v519
        %v521 = vpop.f32.mrb[0].mxu0
        %522 = vmatprep.mubr.bf16.mxu0 0
        %523 = vmatmul.mubr.bf16.gmra.mrb[0].mxu0 %v342
        %v524 = vpop.f32.mrb[0].mxu0
        %v525 = vadd.f32 %v408, %v524
        %v526 = vpop.f32.mrb[0].mxu0
        %v527 = vpop.f32.mrb[0].mxu0
        %v528 = vadd.f32 %v411, %v527
        %v529 = vpop.f32.mrb[0].mxu0
        %530 = vmatprep.mubr.bf16.mxu0 0
        %531 = vmatmul.mubr.bf16.gmra.mrb[0].mxu0 %v345
        %v532 = vpop.f32.mrb[0].mxu0
        %v533 = vadd.f32 %v416, %v532
        %v534 = vpop.f32.mrb[0].mxu0
        %v535 = vpop.f32.mrb[0].mxu0
        %v536 = vadd.f32 %v419, %v535
        %v537 = vpop.f32.mrb[0].mxu0
        %538 = vmatprep.mubr.bf16.mxu0 0
        %539 = vmatmul.mubr.bf16.gmra.mrb[0].mxu0 %v348
        %v540 = vpop.f32.mrb[0].mxu0
        %v541 = vadd.f32 %v424, %v540
        %v542 = vpop.f32.mrb[0].mxu0
        %v543 = vpop.f32.mrb[0].mxu0
        %v544 = vadd.f32 %v427, %v543
        %v545 = vpop.f32.mrb[0].mxu0
        %546 = vmatprep.mubr.bf16.mxu0 0
        %547 = vmatmul.mubr.bf16.gmra.mrb[0].mxu0 %v351
        %v548 = vpop.f32.mrb[0].mxu0
        %v549 = vadd.f32 %v432, %v548
        %v550 = vpop.f32.mrb[0].mxu0
        %v551 = vpop.f32.mrb[0].mxu0
        %v552 = vadd.f32 %v435, %v551
        %v553 = vpop.f32.mrb[0].mxu0
        %554 = vmatprep.mubr.bf16.mxu0 0
        %555 = vmatmul.mubr.bf16.gmra.mrb[0].mxu0 %v354
        %v556 = vpop.f32.mrb[0].mxu0
        %v557 = vadd.f32 %v440, %v556
        %v558 = vpop.f32.mrb[0].mxu0
        %v559 = vpop.f32.mrb[0].mxu0
        %v560 = vadd.f32 %v443, %v559
        %v561 = vpop.f32.mrb[0].mxu0
        %562 = vmatprep.mubr.bf16.mxu0 0
        %563 = vmatmul.mubr.bf16.gmra.mrb[0].mxu0 %v357
        %v564 = vpop.f32.mrb[0].mxu0
        %v565 = vadd.f32 %v448, %v564
        %v566 = vpop.f32.mrb[0].mxu0
        %v567 = vpop.f32.mrb[0].mxu0
        %v568 = vadd.f32 %v451, %v567
        %v569 = vpop.f32.mrb[0].mxu0
        %570 = vmatprep.mubr.bf16.mxu0 0
        %571 = vmatmul.mubr.bf16.gmra.mrb[0].mxu0 %v360
        %v572 = vpop.f32.mrb[0].mxu0
        %v573 = vadd.f32 %v456, %v572
        %v574 = vpop.f32.mrb[0].mxu0
        %v575 = vpop.f32.mrb[0].mxu0
        %v576 = vadd.f32 %v459, %v575
        %v577 = vpop.f32.mrb[0].mxu0
        %578 = vdwg.mxu0
        %v579 = vld [vmem:[%s253] sm:$0xf]
        %v580 = vld [vmem:[%s253 + $0x4] sm:$0xf]
        %v583 = vunpack.c.l.b16 %v579
        %v584 = vunpack.c.l.b16 %v580
        %v585 = vpack.c.b16 %v584, %v583
        %v587 = vsel %vm340, %v585, 0
        %589 = vmatprep.subr.bf16.mxu0 0
        %590 = vmatpush1.bf16.msra.mxu0 %v336
        %591 = vmatprep.subr.bf16.mxu0 0
        %592 = vmatpush1.bf16.msra.mxu0 %v337
        %593 = vmatprep.subr.bf16.mxu0 0
        %594 = vmatpush1.bf16.msra.mxu0 0
        %595 = vmatprep.subr.bf16.mxu0 0
        %596 = vmatpush1.bf16.msra.mxu0 0
        %597 = vmatprep.subr.bf16.mxu0 0
        %598 = vmatpush1.bf16.msra.mxu0 0
        %599 = vmatprep.subr.bf16.mxu0 0
        %600 = vmatpush1.bf16.msra.mxu0 0
        %601 = vmatprep.subr.bf16.mxu0 0
        %602 = vmatpush1.bf16.msra.mxu0 0
        %603 = vmatprep.subr.bf16.mxu0 0
        %604 = vmatpush1.bf16.msra.mxu0 0
        %605 = vmatprep.subr.bf16.mxu0 0
        %606 = vmatpush1.bf16.msra.mxu0 0
        %607 = vmatprep.subr.bf16.mxu0 0
        %608 = vmatpush1.bf16.msra.mxu0 0
        %609 = vmatprep.subr.bf16.mxu0 0
        %610 = vmatpush1.bf16.msra.mxu0 0
        %611 = vmatprep.subr.bf16.mxu0 0
        %612 = vmatpush1.bf16.msra.mxu0 0
        %613 = vmatprep.subr.bf16.mxu0 0
        %614 = vmatpush1.bf16.msra.mxu0 0
        %615 = vmatprep.subr.bf16.mxu0 0
        %616 = vmatpush1.bf16.msra.mxu0 0
        %617 = vmatprep.subr.bf16.mxu0 0
        %618 = vmatpush1.bf16.msra.mxu0 0
        %619 = vmatprep.subr.bf16.mxu0 0
        %620 = vmatpush1.bf16.msra.mxu0 0
        %621 = vmatprep.mubr.bf16.mxu0 0
        %622 = vmatmul.mubr.bf16.gmra.mrb[0].mxu0 %v587
        %v623 = vpop.f32.mrb[0].mxu0
        %v624 = vadd.f32 0.0, %v623
        %v625 = vpop.f32.mrb[0].mxu0
        %v626 = vpop.f32.mrb[0].mxu0
        %v627 = vadd.f32 0.0, %v626
        %v628 = vpop.f32.mrb[0].mxu0
        %629 = vdwg.mxu0
        %630 = vmatprep.subr.bf16.mxu0 0
        %631 = vmatpush1.bf16.msra.mxu0 %v475
        %632 = vmatprep.subr.bf16.mxu0 0
        %633 = vmatpush1.bf16.msra.mxu0 %v476
        %634 = vmatprep.subr.bf16.mxu0 0
        %635 = vmatpush1.bf16.msra.mxu0 0
        %636 = vmatprep.subr.bf16.mxu0 0
        %637 = vmatpush1.bf16.msra.mxu0 0
        %638 = vmatprep.subr.bf16.mxu0 0
        %639 = vmatpush1.bf16.msra.mxu0 0
        %640 = vmatprep.subr.bf16.mxu0 0
        %641 = vmatpush1.bf16.msra.mxu0 0
        %642 = vmatprep.subr.bf16.mxu0 0
        %643 = vmatpush1.bf16.msra.mxu0 0
        %644 = vmatprep.subr.bf16.mxu0 0
        %645 = vmatpush1.bf16.msra.mxu0 0
        %646 = vmatprep.subr.bf16.mxu0 0
        %647 = vmatpush1.bf16.msra.mxu0 0
        %648 = vmatprep.subr.bf16.mxu0 0
        %649 = vmatpush1.bf16.msra.mxu0 0
        %650 = vmatprep.subr.bf16.mxu0 0
        %651 = vmatpush1.bf16.msra.mxu0 0
        %652 = vmatprep.subr.bf16.mxu0 0
        %653 = vmatpush1.bf16.msra.mxu0 0
        %654 = vmatprep.subr.bf16.mxu0 0
        %655 = vmatpush1.bf16.msra.mxu0 0
        %656 = vmatprep.subr.bf16.mxu0 0
        %657 = vmatpush1.bf16.msra.mxu0 0
        %658 = vmatprep.subr.bf16.mxu0 0
        %659 = vmatpush1.bf16.msra.mxu0 0
        %660 = vmatprep.subr.bf16.mxu0 0
        %661 = vmatpush1.bf16.msra.mxu0 0
        %662 = vmatprep.mubr.bf16.mxu0 0
        %663 = vmatmul.mubr.bf16.gmra.mrb[0].mxu0 %v363
        %v664 = vpop.f32.mrb[0].mxu0
        %v665 = vadd.f32 %v624, %v664
        %v666 = vpop.f32.mrb[0].mxu0
        %v667 = vpop.f32.mrb[0].mxu0
        %v668 = vadd.f32 %v627, %v667
        %v669 = vpop.f32.mrb[0].mxu0
        %670 = vdwg.mxu0
        %s671 = scalar_lea.vmem %s234, %s260 [#allocation2]
        %672 = vst [vmem:[%s671] sm:$0xff] %v517
        %673 = vst [vmem:[%s671 + $0x8] sm:$0xff] %v520
        %674 = vst [vmem:[%s671 + $0x10] sm:$0xff] %v525
        %675 = vst [vmem:[%s671 + $0x18] sm:$0xff] %v528
        %676 = vst [vmem:[%s671 + $0x20] sm:$0xff] %v533
        %677 = vst [vmem:[%s671 + $0x28] sm:$0xff] %v536
        %678 = vst [vmem:[%s671 + $0x30] sm:$0xff] %v541
        %679 = vst [vmem:[%s671 + $0x38] sm:$0xff] %v544
        %680 = vst [vmem:[%s671 + $0x40] sm:$0xff] %v549
        %681 = vst [vmem:[%s671 + $0x48] sm:$0xff] %v552
        %682 = vst [vmem:[%s671 + $0x50] sm:$0xff] %v557
        %683 = vst [vmem:[%s671 + $0x58] sm:$0xff] %v560
        %684 = vst [vmem:[%s671 + $0x60] sm:$0xff] %v565
        %685 = vst [vmem:[%s671 + $0x68] sm:$0xff] %v568
        %686 = vst [vmem:[%s671 + $0x70] sm:$0xff] %v573
        %687 = vst [vmem:[%s671 + $0x78] sm:$0xff] %v576
        %s688 = sadd.s32 %s260, 128
        %s689 = scalar_lea.vmem %s234, %s688 [#allocation2]
        %690 = vst [vmem:[%s689] sm:$0xff] %v665
        %691 = vst [vmem:[%s689 + $0x8] sm:$0xff] %v668
        %p692 = scmp.eq.s32.totalorder %s24, 0
        // Predicated region
        $region33: #{tpu_custom_call.1} parent=31 // pred_check
          %p693 = pneg %p692
        $region34: #{tpu_custom_call.1} parent=31 // pred_check_branch
          %695 = sbr.rel (%p693) target = $region36
        $region35: #{tpu_custom_call.1} parent=31 // pred_region
          %v696 = vlaneseq
          %v697 = vshrl.u32 %v696, 7
          %v698 = vadd.s32 %v697, 8
          %v699 = vadd.s32 %v697, 16
          %v700 = vadd.s32 %v697, 24
          %v701 = vadd.s32 %v697, 32
          %v702 = vadd.s32 %v697, 40
          %v703 = vadd.s32 %v697, 48
          %v704 = vadd.s32 %v697, 56
          %v705 = vadd.s32 %v697, 64
          %v706 = vadd.s32 %v697, 72
          %v707 = vadd.s32 %v697, 80
          %v708 = vadd.s32 %v697, 88
          %v709 = vadd.s32 %v697, 96
          %v710 = vadd.s32 %v697, 104
          %v711 = vadd.s32 %v697, 112
          %v712 = vadd.s32 %v697, 120
          %vm713 = vcmp.lt.s32.totalorder %v697, 0
          %v714 = vsub.s32 0, %v697
          %v715 = vsel %vm713, %v714, %v697
          %v716 = vshrl.u32 %v715, 4
          %v717 = vand.u32 %v715, 15
          %v718 = vsub.s32 0, %v717
          %v719 = vsel %vm713, %v718, %v717
          %vm720 = vcmp.lt.s32.totalorder %v698, 0
          %v721 = vsub.s32 0, %v698
          %v722 = vsel %vm720, %v721, %v698
          %v723 = vshrl.u32 %v722, 4
          %v724 = vand.u32 %v722, 15
          %v725 = vsub.s32 0, %v724
          %v726 = vsel %vm720, %v725, %v724
          %vm727 = vcmp.lt.s32.totalorder %v699, 0
          %v728 = vsub.s32 0, %v699
          %v729 = vsel %vm727, %v728, %v699
          %v730 = vshrl.u32 %v729, 4
          %v731 = vand.u32 %v729, 15
          %v732 = vsub.s32 0, %v731
          %v733 = vsel %vm727, %v732, %v731
          %vm734 = vcmp.lt.s32.totalorder %v700, 0
          %v735 = vsub.s32 0, %v700
          %v736 = vsel %vm734, %v735, %v700
          %v737 = vshrl.u32 %v736, 4
          %v738 = vand.u32 %v736, 15
          %v739 = vsub.s32 0, %v738
          %v740 = vsel %vm734, %v739, %v738
          %vm741 = vcmp.lt.s32.totalorder %v701, 0
          %v742 = vsub.s32 0, %v701
          %v743 = vsel %vm741, %v742, %v701
          %v744 = vshrl.u32 %v743, 4
          %v745 = vand.u32 %v743, 15
          %v746 = vsub.s32 0, %v745
          %v747 = vsel %vm741, %v746, %v745
          %vm748 = vcmp.lt.s32.totalorder %v702, 0
          %v749 = vsub.s32 0, %v702
          %v750 = vsel %vm748, %v749, %v702
          %v751 = vshrl.u32 %v750, 4
          %v752 = vand.u32 %v750, 15
          %v753 = vsub.s32 0, %v752
          %v754 = vsel %vm748, %v753, %v752
          %vm755 = vcmp.lt.s32.totalorder %v703, 0
          %v756 = vsub.s32 0, %v703
          %v757 = vsel %vm755, %v756, %v703
          %v758 = vshrl.u32 %v757, 4
          %v759 = vand.u32 %v757, 15
          %v760 = vsub.s32 0, %v759
          %v761 = vsel %vm755, %v760, %v759
          %vm762 = vcmp.lt.s32.totalorder %v704, 0
          %v763 = vsub.s32 0, %v704
          %v764 = vsel %vm762, %v763, %v704
          %v765 = vshrl.u32 %v764, 4
          %v766 = vand.u32 %v764, 15
          %v767 = vsub.s32 0, %v766
          %v768 = vsel %vm762, %v767, %v766
          %vm769 = vcmp.lt.s32.totalorder %v705, 0
          %v770 = vsub.s32 0, %v705
          %v771 = vsel %vm769, %v770, %v705
          %v772 = vshrl.u32 %v771, 4
          %v773 = vand.u32 %v771, 15
          %v774 = vsub.s32 0, %v773
          %v775 = vsel %vm769, %v774, %v773
          %vm776 = vcmp.lt.s32.totalorder %v706, 0
          %v777 = vsub.s32 0, %v706
          %v778 = vsel %vm776, %v777, %v706
          %v779 = vshrl.u32 %v778, 4
          %v780 = vand.u32 %v778, 15
          %v781 = vsub.s32 0, %v780
          %v782 = vsel %vm776, %v781, %v780
          %vm783 = vcmp.lt.s32.totalorder %v707, 0
          %v784 = vsub.s32 0, %v707
          %v785 = vsel %vm783, %v784, %v707
          %v786 = vshrl.u32 %v785, 4
          %v787 = vand.u32 %v785, 15
          %v788 = vsub.s32 0, %v787
          %v789 = vsel %vm783, %v788, %v787
          %vm790 = vcmp.lt.s32.totalorder %v708, 0
          %v791 = vsub.s32 0, %v708
          %v792 = vsel %vm790, %v791, %v708
          %v793 = vshrl.u32 %v792, 4
          %v794 = vand.u32 %v792, 15
          %v795 = vsub.s32 0, %v794
          %v796 = vsel %vm790, %v795, %v794
          %vm797 = vcmp.lt.s32.totalorder %v709, 0
          %v798 = vsub.s32 0, %v709
          %v799 = vsel %vm797, %v798, %v709
          %v800 = vshrl.u32 %v799, 4
          %v801 = vand.u32 %v799, 15
          %v802 = vsub.s32 0, %v801
          %v803 = vsel %vm797, %v802, %v801
          %vm804 = vcmp.lt.s32.totalorder %v710, 0
          %v805 = vsub.s32 0, %v710
          %v806 = vsel %vm804, %v805, %v710
          %v807 = vshrl.u32 %v806, 4
          %v808 = vand.u32 %v806, 15
          %v809 = vsub.s32 0, %v808
          %v810 = vsel %vm804, %v809, %v808
          %vm811 = vcmp.lt.s32.totalorder %v711, 0
          %v812 = vsub.s32 0, %v711
          %v813 = vsel %vm811, %v812, %v711
          %v814 = vshrl.u32 %v813, 4
          %v815 = vand.u32 %v813, 15
          %v816 = vsub.s32 0, %v815
          %v817 = vsel %vm811, %v816, %v815
          %vm818 = vcmp.lt.s32.totalorder %v712, 0
          %v819 = vsub.s32 0, %v712
          %v820 = vsel %vm818, %v819, %v712
          %v821 = vshrl.u32 %v820, 4
          %v822 = vand.u32 %v820, 15
          %v823 = vsub.s32 0, %v822
          %v824 = vsel %vm818, %v823, %v822
          %vm825 = vcmp.ne.s32.totalorder %v719, 0
          %vm826 = vcmp.ne.s32.totalorder %v726, 0
          %vm827 = vcmp.ne.s32.totalorder %v733, 0
          %vm828 = vcmp.ne.s32.totalorder %v740, 0
          %vm829 = vcmp.ne.s32.totalorder %v747, 0
          %vm830 = vcmp.ne.s32.totalorder %v754, 0
          %vm831 = vcmp.ne.s32.totalorder %v761, 0
          %vm832 = vcmp.ne.s32.totalorder %v768, 0
          %vm833 = vcmp.ne.s32.totalorder %v775, 0
          %vm834 = vcmp.ne.s32.totalorder %v782, 0
          %vm835 = vcmp.ne.s32.totalorder %v789, 0
          %vm836 = vcmp.ne.s32.totalorder %v796, 0
          %vm837 = vcmp.ne.s32.totalorder %v803, 0
          %vm838 = vcmp.ne.s32.totalorder %v810, 0
          %vm839 = vcmp.ne.s32.totalorder %v817, 0
          %vm840 = vcmp.ne.s32.totalorder %v824, 0
          %vm841 = vcmp.lt.s32.totalorder %v719, 0
          %vm842 = vcmp.lt.s32.totalorder %v726, 0
          %vm843 = vcmp.lt.s32.totalorder %v733, 0
          %vm844 = vcmp.lt.s32.totalorder %v740, 0
          %vm845 = vcmp.lt.s32.totalorder %v747, 0
          %vm846 = vcmp.lt.s32.totalorder %v754, 0
          %vm847 = vcmp.lt.s32.totalorder %v761, 0
          %vm848 = vcmp.lt.s32.totalorder %v768, 0
          %vm849 = vcmp.lt.s32.totalorder %v775, 0
          %vm850 = vcmp.lt.s32.totalorder %v782, 0
          %vm851 = vcmp.lt.s32.totalorder %v789, 0
          %vm852 = vcmp.lt.s32.totalorder %v796, 0
          %vm853 = vcmp.lt.s32.totalorder %v803, 0
          %vm854 = vcmp.lt.s32.totalorder %v810, 0
          %vm855 = vcmp.lt.s32.totalorder %v817, 0
          %vm856 = vcmp.lt.s32.totalorder %v824, 0
          %vm857 = vmand %vm841, %vm825
          %vm858 = vmand %vm842, %vm826
          %vm859 = vmand %vm843, %vm827
          %vm860 = vmand %vm844, %vm828
          %vm861 = vmand %vm845, %vm829
          %vm862 = vmand %vm846, %vm830
          %vm863 = vmand %vm847, %vm831
          %vm864 = vmand %vm848, %vm832
          %vm865 = vmand %vm849, %vm833
          %vm866 = vmand %vm850, %vm834
          %vm867 = vmand %vm851, %vm835
          %vm868 = vmand %vm852, %vm836
          %vm869 = vmand %vm853, %vm837
          %vm870 = vmand %vm854, %vm838
          %vm871 = vmand %vm855, %vm839
          %vm872 = vmand %vm856, %vm840
          %v873 = vadd.s32 %v719, 16
          %v874 = vadd.s32 %v726, 16
          %v875 = vadd.s32 %v733, 16
          %v876 = vadd.s32 %v740, 16
          %v877 = vadd.s32 %v747, 16
          %v878 = vadd.s32 %v754, 16
          %v879 = vadd.s32 %v761, 16
          %v880 = vadd.s32 %v768, 16
          %v881 = vadd.s32 %v775, 16
          %v882 = vadd.s32 %v782, 16
          %v883 = vadd.s32 %v789, 16
          %v884 = vadd.s32 %v796, 16
          %v885 = vadd.s32 %v803, 16
          %v886 = vadd.s32 %v810, 16
          %v887 = vadd.s32 %v817, 16
          %v888 = vadd.s32 %v824, 16
          %v889 = vsel %vm857, %v873, %v719
          %v890 = vsel %vm858, %v874, %v726
          %v891 = vsel %vm859, %v875, %v733
          %v892 = vsel %vm860, %v876, %v740
          %v893 = vsel %vm861, %v877, %v747
          %v894 = vsel %vm862, %v878, %v754
          %v895 = vsel %vm863, %v879, %v761
          %v896 = vsel %vm864, %v880, %v768
          %v897 = vsel %vm865, %v881, %v775
          %v898 = vsel %vm866, %v882, %v782
          %v899 = vsel %vm867, %v883, %v789
          %v900 = vsel %vm868, %v884, %v796
          %v901 = vsel %vm869, %v885, %v803
          %v902 = vsel %vm870, %v886, %v810
          %v903 = vsel %vm871, %v887, %v817
          %v904 = vsel %vm872, %v888, %v824
          %vm905 = vcmp.lt.s32.totalorder %v889, 8
          %vm906 = vcmp.lt.s32.totalorder %v890, 8
          %vm907 = vcmp.lt.s32.totalorder %v891, 8
          %vm908 = vcmp.lt.s32.totalorder %v892, 8
          %vm909 = vcmp.lt.s32.totalorder %v893, 8
          %vm910 = vcmp.lt.s32.totalorder %v894, 8
          %vm911 = vcmp.lt.s32.totalorder %v895, 8
          %vm912 = vcmp.lt.s32.totalorder %v896, 8
          %vm913 = vcmp.lt.s32.totalorder %v897, 8
          %vm914 = vcmp.lt.s32.totalorder %v898, 8
          %vm915 = vcmp.lt.s32.totalorder %v899, 8
          %vm916 = vcmp.lt.s32.totalorder %v900, 8
          %vm917 = vcmp.lt.s32.totalorder %v901, 8
          %vm918 = vcmp.lt.s32.totalorder %v902, 8
          %vm919 = vcmp.lt.s32.totalorder %v903, 8
          %vm920 = vcmp.lt.s32.totalorder %v904, 8
          %v921 = vsel %vm905, 1, 0
          %v922 = vsel %vm906, 1, 0
          %v923 = vsel %vm907, 1, 0
          %v924 = vsel %vm908, 1, 0
          %v925 = vsel %vm909, 1, 0
          %v926 = vsel %vm910, 1, 0
          %v927 = vsel %vm911, 1, 0
          %v928 = vsel %vm912, 1, 0
          %v929 = vsel %vm913, 1, 0
          %v930 = vsel %vm914, 1, 0
          %v931 = vsel %vm915, 1, 0
          %v932 = vsel %vm916, 1, 0
          %v933 = vsel %vm917, 1, 0
          %v934 = vsel %vm918, 1, 0
          %v935 = vsel %vm919, 1, 0
          %v936 = vsel %vm920, 1, 0
          %v937 = vcvt.s32.f32 %v921
          %v938 = vcvt.s32.f32 %v922
          %v939 = vcvt.s32.f32 %v923
          %v940 = vcvt.s32.f32 %v924
          %v941 = vcvt.s32.f32 %v925
          %v942 = vcvt.s32.f32 %v926
          %v943 = vcvt.s32.f32 %v927
          %v944 = vcvt.s32.f32 %v928
          %v945 = vcvt.s32.f32 %v929
          %v946 = vcvt.s32.f32 %v930
          %v947 = vcvt.s32.f32 %v931
          %v948 = vcvt.s32.f32 %v932
          %v949 = vcvt.s32.f32 %v933
          %v950 = vcvt.s32.f32 %v934
          %v951 = vcvt.s32.f32 %v935
          %v952 = vcvt.s32.f32 %v936
          %v953 = vld [vmem:[%s234] sm:$0xff]
          %v954 = vld [vmem:[%s234 + $0x8] sm:$0xff]
          %v955 = vld [vmem:[%s234 + $0x10] sm:$0xff]
          %v956 = vld [vmem:[%s234 + $0x18] sm:$0xff]
          %v957 = vld [vmem:[%s234 + $0x20] sm:$0xff]
          %v958 = vld [vmem:[%s234 + $0x28] sm:$0xff]
          %v959 = vld [vmem:[%s234 + $0x30] sm:$0xff]
          %v960 = vld [vmem:[%s234 + $0x38] sm:$0xff]
          %v961 = vld [vmem:[%s234 + $0x40] sm:$0xff]
          %v962 = vld [vmem:[%s234 + $0x48] sm:$0xff]
          %v963 = vld [vmem:[%s234 + $0x50] sm:$0xff]
          %v964 = vld [vmem:[%s234 + $0x58] sm:$0xff]
          %v965 = vld [vmem:[%s234 + $0x60] sm:$0xff]
          %v966 = vld [vmem:[%s234 + $0x68] sm:$0xff]
          %v967 = vld [vmem:[%s234 + $0x70] sm:$0xff]
          %v968 = vld [vmem:[%s234 + $0x78] sm:$0xff]
          %v969 = vmul.f32 %v953, %v937
          %v970 = vmul.f32 %v954, %v938
          %v971 = vmul.f32 %v955, %v939
          %v972 = vmul.f32 %v956, %v940
          %v973 = vmul.f32 %v957, %v941
          %v974 = vmul.f32 %v958, %v942
          %v975 = vmul.f32 %v959, %v943
          %v976 = vmul.f32 %v960, %v944
          %v977 = vmul.f32 %v961, %v945
          %v978 = vmul.f32 %v962, %v946
          %v979 = vmul.f32 %v963, %v947
          %v980 = vmul.f32 %v964, %v948
          %v981 = vmul.f32 %v965, %v949
          %v982 = vmul.f32 %v966, %v950
          %v983 = vmul.f32 %v967, %v951
          %v984 = vmul.f32 %v968, %v952
          %v985 = vadd.f32 %v969, %v970
          %v986 = vadd.f32 %v985, %v971
          %v987 = vadd.f32 %v986, %v972
          %v988 = vadd.f32 %v987, %v973
          %v989 = vadd.f32 %v988, %v974
          %v990 = vadd.f32 %v989, %v975
          %v991 = vadd.f32 %v990, %v976
          %v992 = vadd.f32 %v991, %v977
          %v993 = vadd.f32 %v992, %v978
          %v994 = vadd.f32 %v993, %v979
          %v995 = vadd.f32 %v994, %v980
          %v996 = vadd.f32 %v995, %v981
          %v997 = vadd.f32 %v996, %v982
          %v998 = vadd.f32 %v997, %v983
          %v999 = vadd.f32 %v998, %v984
          %v1000 = vrot.slane %v999, 4
          %v1001 = vadd.f32 %v999, %v1000
          %v1002 = vrot.slane %v1001, 2
          %v1003 = vadd.f32 %v1001, %v1002
          %v1004 = vrot.slane %v1003, 1
          %v1005 = vadd.f32 %v1003, %v1004
          %v1006 = vadd.f32 %v1005, 0.0
          %v1007 = vmul.f32 %v1006, 0.015625
          %v1008 = vsub.f32 %v953, %v1007
          %v1009 = vsub.f32 %v954, %v1007
          %v1010 = vsub.f32 %v955, %v1007
          %v1011 = vsub.f32 %v956, %v1007
          %v1012 = vsub.f32 %v957, %v1007
          %v1013 = vsub.f32 %v958, %v1007
          %v1014 = vsub.f32 %v959, %v1007
          %v1015 = vsub.f32 %v960, %v1007
          %v1016 = vsub.f32 %v961, %v1007
          %v1017 = vsub.f32 %v962, %v1007
          %v1018 = vsub.f32 %v963, %v1007
          %v1019 = vsub.f32 %v964, %v1007
          %v1020 = vsub.f32 %v965, %v1007
          %v1021 = vsub.f32 %v966, %v1007
          %v1022 = vsub.f32 %v967, %v1007
          %v1023 = vsub.f32 %v968, %v1007
          %v1024 = vmul.f32 %v1008, %v937
          %v1025 = vmul.f32 %v1009, %v938
          %v1026 = vmul.f32 %v1010, %v939
          %v1027 = vmul.f32 %v1011, %v940
          %v1028 = vmul.f32 %v1012, %v941
          %v1029 = vmul.f32 %v1013, %v942
          %v1030 = vmul.f32 %v1014, %v943
          %v1031 = vmul.f32 %v1015, %v944
          %v1032 = vmul.f32 %v1016, %v945
          %v1033 = vmul.f32 %v1017, %v946
          %v1034 = vmul.f32 %v1018, %v947
          %v1035 = vmul.f32 %v1019, %v948
          %v1036 = vmul.f32 %v1020, %v949
          %v1037 = vmul.f32 %v1021, %v950
          %v1038 = vmul.f32 %v1022, %v951
          %v1039 = vmul.f32 %v1023, %v952
          %v1040 = vmul.f32 %v1024, %v1024
          %v1041 = vmul.f32 %v1025, %v1025
          %v1042 = vmul.f32 %v1026, %v1026
          %v1043 = vmul.f32 %v1027, %v1027
          %v1044 = vmul.f32 %v1028, %v1028
          %v1045 = vmul.f32 %v1029, %v1029
          %v1046 = vmul.f32 %v1030, %v1030
          %v1047 = vmul.f32 %v1031, %v1031
          %v1048 = vmul.f32 %v1032, %v1032
          %v1049 = vmul.f32 %v1033, %v1033
          %v1050 = vmul.f32 %v1034, %v1034
          %v1051 = vmul.f32 %v1035, %v1035
          %v1052 = vmul.f32 %v1036, %v1036
          %v1053 = vmul.f32 %v1037, %v1037
          %v1054 = vmul.f32 %v1038, %v1038
          %v1055 = vmul.f32 %v1039, %v1039
          %v1056 = vadd.f32 %v1040, %v1041
          %v1057 = vadd.f32 %v1056, %v1042
          %v1058 = vadd.f32 %v1057, %v1043
          %v1059 = vadd.f32 %v1058, %v1044
          %v1060 = vadd.f32 %v1059, %v1045
          %v1061 = vadd.f32 %v1060, %v1046
          %v1062 = vadd.f32 %v1061, %v1047
          %v1063 = vadd.f32 %v1062, %v1048
          %v1064 = vadd.f32 %v1063, %v1049
          %v1065 = vadd.f32 %v1064, %v1050
          %v1066 = vadd.f32 %v1065, %v1051
          %v1067 = vadd.f32 %v1066, %v1052
          %v1068 = vadd.f32 %v1067, %v1053
          %v1069 = vadd.f32 %v1068, %v1054
          %v1070 = vadd.f32 %v1069, %v1055
          %v1071 = vrot.slane %v1070, 4
          %v1072 = vadd.f32 %v1070, %v1071
          %v1073 = vrot.slane %v1072, 2
          %v1074 = vadd.f32 %v1072, %v1073
          %v1075 = vrot.slane %v1074, 1
          %v1076 = vadd.f32 %v1074, %v1075
          %v1077 = vadd.f32 %v1076, 0.0
          %v1078 = vmul.f32 %v1077, 0.015625
          %v1079 = vadd.f32 %v1078, 1e-05
          %v1080 = vrsqrt.pop %v1079
          %v1081 = vmul.f32 %v1007, %v1080
          %v1082 = vmul.f32 %v953, %v1080
          %v1083 = vmul.f32 %v954, %v1080
          %v1084 = vmul.f32 %v955, %v1080
          %v1085 = vmul.f32 %v956, %v1080
          %v1086 = vmul.f32 %v957, %v1080
          %v1087 = vmul.f32 %v958, %v1080
          %v1088 = vmul.f32 %v959, %v1080
          %v1089 = vmul.f32 %v960, %v1080
          %v1090 = vmul.f32 %v961, %v1080
          %v1091 = vmul.f32 %v962, %v1080
          %v1092 = vmul.f32 %v963, %v1080
          %v1093 = vmul.f32 %v964, %v1080
          %v1094 = vmul.f32 %v965, %v1080
          %v1095 = vmul.f32 %v966, %v1080
          %v1096 = vmul.f32 %v967, %v1080
          %v1097 = vmul.f32 %v968, %v1080
          %v1098 = vsub.f32 %v1082, %v1081
          %v1099 = vsub.f32 %v1083, %v1081
          %v1100 = vsub.f32 %v1084, %v1081
          %v1101 = vsub.f32 %v1085, %v1081
          %v1102 = vsub.f32 %v1086, %v1081
          %v1103 = vsub.f32 %v1087, %v1081
          %v1104 = vsub.f32 %v1088, %v1081
          %v1105 = vsub.f32 %v1089, %v1081
          %v1106 = vsub.f32 %v1090, %v1081
          %v1107 = vsub.f32 %v1091, %v1081
          %v1108 = vsub.f32 %v1092, %v1081
          %v1109 = vsub.f32 %v1093, %v1081
          %v1110 = vsub.f32 %v1094, %v1081
          %v1111 = vsub.f32 %v1095, %v1081
          %v1112 = vsub.f32 %v1096, %v1081
          %v1113 = vsub.f32 %v1097, %v1081
          %v1114 = vmul.f32 %v1098, 0.2
          %v1115 = vmul.f32 %v1099, 0.2
          %v1116 = vmul.f32 %v1100, 0.2
          %v1117 = vmul.f32 %v1101, 0.2
          %v1118 = vmul.f32 %v1102, 0.2
          %v1119 = vmul.f32 %v1103, 0.2
          %v1120 = vmul.f32 %v1104, 0.2
          %v1121 = vmul.f32 %v1105, 0.2
          %v1122 = vmul.f32 %v1106, 0.2
          %v1123 = vmul.f32 %v1107, 0.2
          %v1124 = vmul.f32 %v1108, 0.2
          %v1125 = vmul.f32 %v1109, 0.2
          %v1126 = vmul.f32 %v1110, 0.2
          %v1127 = vmul.f32 %v1111, 0.2
          %v1128 = vmul.f32 %v1112, 0.2
          %v1129 = vmul.f32 %v1113, 0.2
          %v1130 = vmax.f32 %v1098, %v1114
          %v1131 = vmax.f32 %v1099, %v1115
          %v1132 = vmax.f32 %v1100, %v1116
          %v1133 = vmax.f32 %v1101, %v1117
          %v1134 = vmax.f32 %v1102, %v1118
          %v1135 = vmax.f32 %v1103, %v1119
          %v1136 = vmax.f32 %v1104, %v1120
          %v1137 = vmax.f32 %v1105, %v1121
          %v1138 = vmax.f32 %v1106, %v1122
          %v1139 = vmax.f32 %v1107, %v1123
          %v1140 = vmax.f32 %v1108, %v1124
          %v1141 = vmax.f32 %v1109, %v1125
          %v1142 = vmax.f32 %v1110, %v1126
          %v1143 = vmax.f32 %v1111, %v1127
          %v1144 = vmax.f32 %v1112, %v1128
          %v1145 = vmax.f32 %v1113, %v1129
          %1146 = vst [vmem:[%s234] sm:$0xff] %v1130
          %1147 = vst [vmem:[%s234 + $0x8] sm:$0xff] %v1131
          %1148 = vst [vmem:[%s234 + $0x10] sm:$0xff] %v1132
          %1149 = vst [vmem:[%s234 + $0x18] sm:$0xff] %v1133
          %1150 = vst [vmem:[%s234 + $0x20] sm:$0xff] %v1134
          %1151 = vst [vmem:[%s234 + $0x28] sm:$0xff] %v1135
          %1152 = vst [vmem:[%s234 + $0x30] sm:$0xff] %v1136
          %1153 = vst [vmem:[%s234 + $0x38] sm:$0xff] %v1137
          %1154 = vst [vmem:[%s234 + $0x40] sm:$0xff] %v1138
          %1155 = vst [vmem:[%s234 + $0x48] sm:$0xff] %v1139
          %1156 = vst [vmem:[%s234 + $0x50] sm:$0xff] %v1140
          %1157 = vst [vmem:[%s234 + $0x58] sm:$0xff] %v1141
          %1158 = vst [vmem:[%s234 + $0x60] sm:$0xff] %v1142
          %1159 = vst [vmem:[%s234 + $0x68] sm:$0xff] %v1143
          %1160 = vst [vmem:[%s234 + $0x70] sm:$0xff] %v1144
          %1161 = vst [vmem:[%s234 + $0x78] sm:$0xff] %v1145
        $region36: #{tpu_custom_call.1} parent=31 // pred_fallthru
          _
        %s1162 = sand.u32 %s128, 1
        %s1163 = scalar_lea.sflag [#allocation3], %s1162
        %s1164 = sand.u32 %s128, 1
        %s1165 = smul.addr %s1164, 144
        %s1166 = scalar_lea.vmem [#allocation2], %s1165
        // Predicated region
        $region37: #{tpu_custom_call.1} parent=31 // pred_check
          %p1167 = pneg %p138
        $region38: #{tpu_custom_call.1} parent=31 // pred_check_branch
          %1169 = sbr.rel (%p1167) target = $region40
        $region39: #{tpu_custom_call.1} parent=31 // pred_region
          %s1171 = ssub.s32 2304, 2304
          %1172 = vsyncadd %s1163, %s1171
          %s1173 = smul.addr %s22, 18
          %s1174 = sadd.s32 %s23, %s1173
          %s1175 = smul.addr %s1174, 128
          %s1176 = scalar_lea.hbm %s3, %s1175
          %s1177 = sshll.u32 %s1166, 4
          %s1178 = int_to_ptr.vmem [resolvable:$true] %s1177
          %1183 = dma.vmem_to_hbm [thread:$0]  %s1178, 2304, %s1176, %s1163, 128, 128, 8
        $region40: #{tpu_custom_call.1} parent=31 // pred_fallthru
          _
      $region32: #{tpu_custom_call.1} parent=5 // pred_fallthru
        _
      %p1184 = scmp.le.s32.totalorder 2, %s12
      // Predicated region
      $region41: #{tpu_custom_call.1} parent=5 // pred_check
        %p1185 = pneg %p1184
      $region42: #{tpu_custom_call.1} parent=5 // pred_check_branch
        %1187 = sbr.rel (%p1185) target = $region44
      $region43: #{tpu_custom_call.1} parent=5 // pred_region
        %s1188 = ssub.s32 %s12, 2
        // Predicated region
        $region45: #{tpu_custom_call.1} parent=43 // pred_check
          %p1189 = pneg %p144
        $region46: #{tpu_custom_call.1} parent=43 // pred_check_branch
          %1191 = sbr.rel (%p1189) target = $region48
        $region47: #{tpu_custom_call.1} parent=43 // pred_region
          %s1192 = sand.u32 %s129, 1
          %s1193 = scalar_lea.sflag [#allocation3], %s1192
          %s1194 = sand.u32 %s129, 1
          %s1195 = smul.addr %s1194, 144
          %s1196 = scalar_lea.vmem [#allocation2], %s1195
          %1197 = dma.done %s1193, 2304
        $region48: #{tpu_custom_call.1} parent=43 // pred_fallthru
          _
      $region44: #{tpu_custom_call.1} parent=5 // pred_fallthru
        _
    $region6: #{tpu_custom_call.1} parent=1 // loop_footer
      %s16 = sadd.s32 1, %s12
    $region7: #{tpu_custom_call.1} parent=1 // loop_footer_branch
      %11 = sbr.rel target = $region3
    $region8: #{tpu_custom_call.1} parent=1 // loop_exit
      _
    %1198 = vsyncpa [#allocation3], 1
    %s1199 = scalar_lea.sflag [#allocation3], 1
    %1200 = vsyncpa %s1199, 1

</llo_original>
